<compile_context>
chip_gen: v6e
topology: v6e:2x2x1
jax: 0.10.0
libtpu: 0.0.40
codegen_flags: <defaults>
</compile_context>

<pallas_src>
import functools
import math

import jax
import jax.numpy as jnp
from jax.experimental import pallas as pl
from jax.experimental.pallas import tpu as pltpu


# ----------------------------------------------------------------------------
# Tile-size helper: largest candidate that evenly divides `dim`, else full dim.
# Candidates are multiples of 8 (sublane) / 128 (lane) so blocks stay legal.
# ----------------------------------------------------------------------------

def _tile(dim, candidates):
    for c in candidates:
        if dim >= c and dim % c == 0:
            return c
    return dim


_M_TILES = (256, 128, 64, 32, 16, 8)   # sublane-dim tiles
_NK_TILES = (512, 256, 128)            # lane-dim tiles


# ----------------------------------------------------------------------------
# Tiled linear: y = act(x @ w + b)
# ----------------------------------------------------------------------------

def _linear_kernel(x_ref, w_ref, b_ref, o_ref, acc_ref, *, activation):
    @pl.when(pl.program_id(2) == 0)
    def _init():
        acc_ref[...] = jnp.zeros_like(acc_ref)

    acc_ref[...] += jnp.dot(x_ref[...], w_ref[...],
                            preferred_element_type=jnp.float32)

    @pl.when(pl.program_id(2) == pl.num_programs(2) - 1)
    def _finalize():
        y = acc_ref[...] + b_ref[...].astype(jnp.float32)
        if activation == "gelu":
            # tanh-approx GELU.
            # TODO(synk): HF BERT default is exact erf-GELU; tanh approx differs
            # slightly but keeps the epilogue on well-supported transcendentals.
            y = 0.5 * y * (1.0 + jnp.tanh(
                0.7978845608028654 * (y + 0.044715 * y * y * y)))
        elif activation == "tanh":
            y = jnp.tanh(y)
        o_ref[...] = y.astype(o_ref.dtype)


def linear(x, w, b, activation="none", out_dtype=jnp.bfloat16):
    """x: (M, K) bf16, w: (K, N) bf16, b: (1, N) f32 -> (M, N) out_dtype."""
    M, K = x.shape
    N = w.shape[1]
    tm = _tile(M, _M_TILES)
    tn = _tile(N, _NK_TILES)
    tk = _tile(K, _NK_TILES)
    return pl.pallas_call(
        functools.partial(_linear_kernel, activation=activation),
        out_shape=jax.ShapeDtypeStruct((M, N), out_dtype),
        grid=(M // tm, N // tn, K // tk),
        in_specs=[
            pl.BlockSpec((tm, tk), lambda i, j, k: (i, k)),
            pl.BlockSpec((tk, tn), lambda i, j, k: (k, j)),
            pl.BlockSpec((1, tn), lambda i, j, k: (0, j)),
        ],
        out_specs=pl.BlockSpec((tm, tn), lambda i, j, k: (i, j)),
        scratch_shapes=[pltpu.VMEM((tm, tn), jnp.float32)],
        compiler_params=pltpu.CompilerParams(
            dimension_semantics=("parallel", "parallel", "arbitrary")),
    )(x, w, b)


# ----------------------------------------------------------------------------
# Fused: y = LayerNorm(x @ w + b + residual) * gamma + beta
# (N is kept whole so the LayerNorm reduction sees the full row.)
# ----------------------------------------------------------------------------

def _linear_res_ln_kernel(x_ref, w_ref, b_ref, r_ref, g_ref, beta_ref,
                          o_ref, acc_ref):
    @pl.when(pl.program_id(1) == 0)
    def _init():
        acc_ref[...] = jnp.zeros_like(acc_ref)

    acc_ref[...] += jnp.dot(x_ref[...], w_ref[...],
                            preferred_element_type=jnp.float32)

    @pl.when(pl.program_id(1) == pl.num_programs(1) - 1)
    def _finalize():
        y = (acc_ref[...] + b_ref[...].astype(jnp.float32)
             + r_ref[...].astype(jnp.float32))
        mu = jnp.mean(y, axis=-1, keepdims=True)
        var = jnp.mean((y - mu) ** 2, axis=-1, keepdims=True)
        xhat = (y - mu) * jax.lax.rsqrt(var + 1e-12)       # BERT LayerNorm eps
        o_ref[...] = (xhat * g_ref[...] + beta_ref[...]).astype(o_ref.dtype)


def linear_residual_layernorm(x, w, b, residual, g, beta,
                              out_dtype=jnp.bfloat16):
    """x: (M, K) bf16, w: (K, N) bf16, residual: (M, N) -> (M, N) out_dtype."""
    M, K = x.shape
    N = w.shape[1]
    tm = _tile(M, _M_TILES)
    tk = _tile(K, _NK_TILES)
    return pl.pallas_call(
        _linear_res_ln_kernel,
        out_shape=jax.ShapeDtypeStruct((M, N), out_dtype),
        grid=(M // tm, K // tk),
        in_specs=[
            pl.BlockSpec((tm, tk), lambda i, k: (i, k)),
            pl.BlockSpec((tk, N), lambda i, k: (k, 0)),
            pl.BlockSpec((1, N), lambda i, k: (0, 0)),
            pl.BlockSpec((tm, N), lambda i, k: (i, 0)),
            pl.BlockSpec((1, N), lambda i, k: (0, 0)),
            pl.BlockSpec((1, N), lambda i, k: (0, 0)),
        ],
        out_specs=pl.BlockSpec((tm, N), lambda i, k: (i, 0)),
        scratch_shapes=[pltpu.VMEM((tm, N), jnp.float32)],
        compiler_params=pltpu.CompilerParams(
            dimension_semantics=("parallel", "arbitrary")),
    )(x, w, b, residual, g, beta)


# ----------------------------------------------------------------------------
# Stand-alone tiled LayerNorm (embeddings)
# ----------------------------------------------------------------------------

def _layernorm_kernel(x_ref, g_ref, b_ref, o_ref):
    x = x_ref[...].astype(jnp.float32)
    mu = jnp.mean(x, axis=-1, keepdims=True)
    var = jnp.mean((x - mu) ** 2, axis=-1, keepdims=True)
    xhat = (x - mu) * jax.lax.rsqrt(var + 1e-12)
    o_ref[...] = (xhat * g_ref[...] + b_ref[...]).astype(o_ref.dtype)


def layernorm(x, g, b, out_dtype=jnp.bfloat16):
    M, H = x.shape
    tm = _tile(M, _M_TILES)
    return pl.pallas_call(
        _layernorm_kernel,
        out_shape=jax.ShapeDtypeStruct((M, H), out_dtype),
        grid=(M // tm,),
        in_specs=[
            pl.BlockSpec((tm, H), lambda i: (i, 0)),
            pl.BlockSpec((1, H), lambda i: (0, 0)),
            pl.BlockSpec((1, H), lambda i: (0, 0)),
        ],
        out_specs=pl.BlockSpec((tm, H), lambda i: (i, 0)),
        compiler_params=pltpu.CompilerParams(
            dimension_semantics=("parallel",)),
    )(x, g, b)


# ----------------------------------------------------------------------------
# Flash-style multi-head attention.
# Inputs stay (B, S, H) lane-dense in HBM; head split/merge happens on the VMEM
# tile inside the kernel (no XLA transposes, no nh-broadcast of the mask).
# Online softmax over kv tiles; the (S, S) score matrix is never materialized.
# ----------------------------------------------------------------------------

def _flash_attn_kernel(q_ref, k_ref, v_ref, bias_ref, o_ref,
                       m_sc, l_sc, acc_sc, *, nh, dh, scale):
    ki = pl.program_id(2)

    @pl.when(ki == 0)
    def _init():
        m_sc[...] = jnp.full_like(m_sc, -1e30)
        l_sc[...] = jnp.zeros_like(l_sc)
        acc_sc[...] = jnp.zeros_like(acc_sc)

    q = q_ref[0]                                   # (tq,  H) bf16
    k = k_ref[0]                                   # (tkv, H) bf16
    v = v_ref[0]                                   # (tkv, H) bf16
    tq = q.shape[0]
    tkv = k.shape[0]

    qh = q.reshape(tq, nh, dh).transpose(1, 0, 2)  # (nh, tq,  dh)
    kh = k.reshape(tkv, nh, dh).transpose(1, 0, 2)  # (nh, tkv, dh)
    vh = v.reshape(tkv, nh, dh).transpose(1, 0, 2)  # (nh, tkv, dh)

    s = jnp.einsum("nqd,nkd->nqk", qh, kh,
                   preferred_element_type=jnp.float32)          # (nh, tq, tkv)
    s = s * scale + bias_ref[0]                                  # mask (1, tkv)

    m_new = jnp.maximum(m_sc[...], jnp.max(s, axis=-1, keepdims=True))
    alpha = jnp.exp(m_sc[...] - m_new)
    p = jnp.exp(s - m_new)
    l_sc[...] = alpha * l_sc[...] + jnp.sum(p, axis=-1, keepdims=True)
    acc_sc[...] = alpha * acc_sc[...] + jnp.einsum(
        "nqk,nkd->nqd", p.astype(vh.dtype), vh,
        preferred_element_type=jnp.float32)
    m_sc[...] = m_new

    @pl.when(ki == pl.num_programs(2) - 1)
    def _finalize():
        out = acc_sc[...] * pl.reciprocal(l_sc[...], approx=True)  # (nh, tq, dh)
        out = out.transpose(1, 0, 2).reshape(tq, nh * dh)          # (tq, H)
        o_ref[0] = out.astype(o_ref.dtype)


def attention(q, k, v, mask_bias, *, nh):
    """q/k/v: (B, S, H) bf16, mask_bias: (B, 1, S) f32 -> (B, S, H) bf16."""
    B, S, H = q.shape
    dh = H // nh
    tq = _tile(S, (128, 64, 32, 16, 8))
    tkv = _tile(S, (128,))
    scale = 1.0 / math.sqrt(dh)
    return pl.pallas_call(
        functools.partial(_flash_attn_kernel, nh=nh, dh=dh, scale=scale),
        out_shape=jax.ShapeDtypeStruct((B, S, H), jnp.bfloat16),
        grid=(B, S // tq, S // tkv),
        in_specs=[
            pl.BlockSpec((1, tq, H), lambda b, qi, ki: (b, qi, 0)),
            pl.BlockSpec((1, tkv, H), lambda b, qi, ki: (b, ki, 0)),
            pl.BlockSpec((1, tkv, H), lambda b, qi, ki: (b, ki, 0)),
            pl.BlockSpec((1, 1, tkv), lambda b, qi, ki: (b, 0, ki)),
        ],
        out_specs=pl.BlockSpec((1, tq, H), lambda b, qi, ki: (b, qi, 0)),
        scratch_shapes=[
            pltpu.VMEM((nh, tq, 1), jnp.float32),
            pltpu.VMEM((nh, tq, 1), jnp.float32),
            pltpu.VMEM((nh, tq, dh), jnp.float32),
        ],
        compiler_params=pltpu.CompilerParams(
            dimension_semantics=("parallel", "parallel", "arbitrary")),
    )(q, k, v, mask_bias)


# ----------------------------------------------------------------------------
# Mean cross-entropy (tiny; whole-block kernel is fine here)
# ----------------------------------------------------------------------------

def _ce_kernel(logits_ref, onehot_ref, loss_ref):
    logits = logits_ref[...]                      # (B, L) f32
    onehot = onehot_ref[...]                      # (B, L) f32
    m = jnp.max(logits, axis=-1, keepdims=True)
    lse = jnp.log(jnp.sum(jnp.exp(logits - m), axis=-1, keepdims=True)) + m
    nll = lse - jnp.sum(onehot * logits, axis=-1, keepdims=True)
    loss_ref[...] = jnp.mean(nll, axis=0, keepdims=True)


def cross_entropy(logits, onehot):
    B, L = logits.shape
    out = pl.pallas_call(
        _ce_kernel,
        out_shape=jax.ShapeDtypeStruct((1, 1), jnp.float32),
        grid=(1,),
        in_specs=[
            pl.BlockSpec((B, L), lambda i: (0, 0)),
            pl.BlockSpec((B, L), lambda i: (0, 0)),
        ],
        out_specs=pl.BlockSpec((1, 1), lambda i: (0, 0)),
    )(logits, onehot)
    return out[0, 0]


# ----------------------------------------------------------------------------
# Parameter init (deterministic, synthetic — no checkpoint loading)
# Matmul weights are stored bf16 (MXU-native); biases / LN params stay f32.
# Q/K/V weights are stored pre-fused as a single (H, 3H) projection.
# ----------------------------------------------------------------------------

def init_params(cfg, seed=0):
    base = jax.random.PRNGKey(seed)
    counter = [0]

    def nxt():
        counter[0] += 1
        return jax.random.fold_in(base, counter[0])

    def dense(fi, fo):
        w = 0.02 * jax.random.normal(nxt(), (fi, fo), jnp.float32)
        return {"w": w.astype(jnp.bfloat16),
                "b": jnp.zeros((1, fo), jnp.float32)}

    def ln(h):
        return {"g": jnp.ones((1, h), jnp.float32),
                "b": jnp.zeros((1, h), jnp.float32)}

    H = cfg["hidden"]
    params = {
        "word_emb": 0.02 * jax.random.normal(nxt(), (cfg["vocab"], H), jnp.float32),
        "pos_emb": 0.02 * jax.random.normal(nxt(), (cfg["max_pos"], H), jnp.float32),
        "type_emb": 0.02 * jax.random.normal(nxt(), (cfg["type_vocab"], H), jnp.float32),
        "emb_ln": ln(H),
        "layers": [],
        "pooler": dense(H, H),
        "classifier": dense(H, cfg["num_labels"]),
    }
    for _ in range(cfg["layers"]):
        params["layers"].append({
            "qkv": dense(H, 3 * H),                 # fused Q/K/V projection
            "attn_out": dense(H, H), "attn_ln": ln(H),
            "ffn_in": dense(H, cfg["intermediate"]),
            "ffn_out": dense(cfg["intermediate"], H),
            "ffn_ln": ln(H),
        })
    return params


# ----------------------------------------------------------------------------
# Forward pass (BertModel -> pooled_output -> dropout -> classifier -> CE loss)
# ----------------------------------------------------------------------------

def bert_with_pgd_forward(params, cfg, input_ids, attention_mask, labels):
    B, S = input_ids.shape
    H = cfg["hidden"]
    nh = cfg["heads"]

    # --- embeddings (gather is glue; layernorm is a Pallas kernel) ---
    x = (params["word_emb"][input_ids]
         + params["pos_emb"][:S][None, :, :]
         + params["type_emb"][0][None, None, :])                 # (B, S, H) f32
    x2 = layernorm(x.reshape(B * S, H),
                   params["emb_ln"]["g"], params["emb_ln"]["b"])  # (B*S, H) bf16
    # TODO(synk): embedding / hidden / classifier dropout run as identity (eval mode).

    # additive attention-mask bias, kept (B, 1, S) — the kernel broadcasts over heads
    mask_bias = ((1.0 - attention_mask.astype(jnp.float32)) * -10000.0)[:, None, :]

    # --- transformer encoder layers ---
    for lp in params["layers"]:
        # fused Q/K/V projection: one matmul over (H, 3H)
        qkv = linear(x2, lp["qkv"]["w"], lp["qkv"]["b"])          # (B*S, 3H) bf16
        qkv = qkv.reshape(B, S, 3 * H)
        q = qkv[:, :, :H]
        k = qkv[:, :, H:2 * H]
        v = qkv[:, :, 2 * H:]

        ctx = attention(q, k, v, mask_bias, nh=nh)                # (B, S, H) bf16

        # attn output proj + residual + LayerNorm fused in one kernel
        x2 = linear_residual_layernorm(
            ctx.reshape(B * S, H), lp["attn_out"]["w"], lp["attn_out"]["b"],
            x2, lp["attn_ln"]["g"], lp["attn_ln"]["b"])

        # FFN: matmul+GELU fused, then matmul + residual + LayerNorm fused
        h = linear(x2, lp["ffn_in"]["w"], lp["ffn_in"]["b"], activation="gelu")
        x2 = linear_residual_layernorm(
            h, lp["ffn_out"]["w"], lp["ffn_out"]["b"],
            x2, lp["ffn_ln"]["g"], lp["ffn_ln"]["b"])

    # --- pooler: tanh(dense(hidden[:, 0])) ---
    hidden = x2.reshape(B, S, H)
    cls = hidden[:, 0, :]                                         # (B, H) bf16
    pooled = linear(cls, params["pooler"]["w"], params["pooler"]["b"],
                    activation="tanh")

    # --- classifier head + cross-entropy loss ---
    logits = linear(pooled, params["classifier"]["w"], params["classifier"]["b"],
                    out_dtype=jnp.float32)                        # (B, num_labels)
    onehot = jax.nn.one_hot(labels.reshape(-1), cfg["num_labels"], dtype=jnp.float32)
    loss = cross_entropy(logits, onehot)
    return loss, logits


# ----------------------------------------------------------------------------
# Main
# ----------------------------------------------------------------------------

if __name__ == "__main__":
    cfg = dict(vocab=100, hidden=32, layers=2, heads=4, intermediate=64,
               max_pos=16, type_vocab=2, num_labels=3)
    params = init_params(cfg, seed=0)

    key = jax.random.PRNGKey(0)
    k_ids, k_lab = jax.random.split(key, 2)
    B, S = 2, 8
    input_ids = jax.random.randint(k_ids, (B, S), 0, cfg["vocab"], dtype=jnp.int32)
    attention_mask = jnp.concatenate(
        [jnp.ones((B, 6), jnp.int32), jnp.zeros((B, 2), jnp.int32)], axis=1)
    labels = jax.random.randint(k_lab, (B,), 0, cfg["num_labels"], dtype=jnp.int32)

    loss, logits = bert_with_pgd_forward(params, cfg, input_ids, attention_mask, labels)
    jax.block_until_ready((loss, logits))
    assert logits.shape == (B, cfg["num_labels"])
    assert bool(jnp.isfinite(loss))
    print("KERNEL_OK")
</pallas_src>

<mosaic_0001>
module attributes {stable_mosaic.version = 11 : i64} {
  func.func @_layernorm_kernel(%arg0: i32, %arg1: memref<16x32xf32, #tpu.memory_space<vmem>>, %arg2: memref<1x32xf32, #tpu.memory_space<vmem>>, %arg3: memref<1x32xf32, #tpu.memory_space<vmem>>, %arg4: memref<16x32xbf16, #tpu.memory_space<vmem>>) attributes {dimension_semantics = [#tpu.dimension_semantics<parallel>], iteration_bounds = array<i64: 1>, scalar_prefetch = 0 : i64, scratch_operands = 0 : i64, tpu.core_type = #tpu.core_type<tc>, window_params = [{transform_indices = @transform_0, window_bounds = array<i64: 16, 32>}, {pipeline_mode = #tpu.pipeline_mode<synchronous>, transform_indices = @transform_1, window_bounds = array<i64: 1, 32>}, {pipeline_mode = #tpu.pipeline_mode<synchronous>, transform_indices = @transform_2, window_bounds = array<i64: 1, 32>}, {transform_indices = @transform_3, window_bounds = array<i64: 16, 32>}]} {
    %c0 = arith.constant 0 : index
    %c0_0 = arith.constant 0 : index
    %0 = vector.load %arg1[%c0, %c0_0] : memref<16x32xf32, #tpu.memory_space<vmem>>, vector<16x32xf32>
    %cst = arith.constant dense<0.000000e+00> : vector<16xf32>
    %1 = vector.multi_reduction <add>, %0, %cst [1] : vector<16x32xf32> to vector<16xf32>
    %2 = vector.shape_cast %1 : vector<16xf32> to vector<16x1xf32>
    %cst_1 = arith.constant 3.200000e+01 : f32
    %3 = vector.broadcast %cst_1 : f32 to vector<16x1xf32>
    %4 = arith.divf %2, %3 : vector<16x1xf32>
    %5 = vector.broadcast %4 : vector<16x1xf32> to vector<16x32xf32>
    %6 = arith.subf %0, %5 : vector<16x32xf32>
    %7 = arith.mulf %6, %6 : vector<16x32xf32>
    %cst_2 = arith.constant dense<0.000000e+00> : vector<16xf32>
    %8 = vector.multi_reduction <add>, %7, %cst_2 [1] : vector<16x32xf32> to vector<16xf32>
    %9 = vector.shape_cast %8 : vector<16xf32> to vector<16x1xf32>
    %cst_3 = arith.constant 3.200000e+01 : f32
    %10 = vector.broadcast %cst_3 : f32 to vector<16x1xf32>
    %11 = arith.divf %9, %10 : vector<16x1xf32>
    %12 = vector.broadcast %4 : vector<16x1xf32> to vector<16x32xf32>
    %13 = arith.subf %0, %12 : vector<16x32xf32>
    %cst_4 = arith.constant 9.99999996E-13 : f32
    %14 = vector.broadcast %cst_4 : f32 to vector<16x1xf32>
    %15 = arith.addf %11, %14 : vector<16x1xf32>
    %16 = math.rsqrt %15 : vector<16x1xf32>
    %17 = vector.broadcast %16 : vector<16x1xf32> to vector<16x32xf32>
    %18 = arith.mulf %13, %17 : vector<16x32xf32>
    %c0_5 = arith.constant 0 : index
    %c0_6 = arith.constant 0 : index
    %19 = vector.load %arg2[%c0_5, %c0_6] : memref<1x32xf32, #tpu.memory_space<vmem>>, vector<1x32xf32>
    %20 = vector.broadcast %19 : vector<1x32xf32> to vector<16x32xf32>
    %21 = arith.mulf %18, %20 : vector<16x32xf32>
    %c0_7 = arith.constant 0 : index
    %c0_8 = arith.constant 0 : index
    %22 = vector.load %arg3[%c0_7, %c0_8] : memref<1x32xf32, #tpu.memory_space<vmem>>, vector<1x32xf32>
    %23 = vector.broadcast %22 : vector<1x32xf32> to vector<16x32xf32>
    %24 = arith.addf %21, %23 : vector<16x32xf32>
    %25 = arith.truncf %24 : vector<16x32xf32> to vector<16x32xbf16>
    %c0_9 = arith.constant 0 : index
    %c0_10 = arith.constant 0 : index
    %26 = vector.load %arg4[%c0_9, %c0_10] : memref<16x32xbf16, #tpu.memory_space<vmem>>, vector<16x32xbf16>
    tpu.vector_store %arg4[%c0_9, %c0_10], %25 {strides = array<i32>} : memref<16x32xbf16, #tpu.memory_space<vmem>>, vector<16x32xbf16>,
    return
  }
  func.func @transform_0(%arg0: i32) -> (i32, i32) {
    %c0_i32 = arith.constant 0 : i32
    %c0_i32_0 = arith.constant 0 : i32
    return %arg0, %c0_i32 : i32, i32
  }
  func.func @transform_1(%arg0: i32) -> (i32, i32) {
    %c0_i32 = arith.constant 0 : i32
    %c0_i32_0 = arith.constant 0 : i32
    %c0_i32_1 = arith.constant 0 : i32
    return %c0_i32, %c0_i32_0 : i32, i32
  }
  func.func @transform_2(%arg0: i32) -> (i32, i32) {
    %c0_i32 = arith.constant 0 : i32
    %c0_i32_0 = arith.constant 0 : i32
    %c0_i32_1 = arith.constant 0 : i32
    return %c0_i32, %c0_i32_0 : i32, i32
  }
  func.func @transform_3(%arg0: i32) -> (i32, i32) {
    %c0_i32 = arith.constant 0 : i32
    %c0_i32_0 = arith.constant 0 : i32
    return %arg0, %c0_i32 : i32, i32
  }
}

</mosaic_0001>

<llo_original>
// kernel: tpu_custom_call.1
$region0: #{tpu_custom_call.1}
  #allocation0 [shape = 'u32[]', space=smem, size = 0x4, offset = 0x4, fixed_abs, tag = 'smem constant byte address 0x4 - core index']
  #allocation1 [shape = 'u32[144,128]{1,0:T(1,128)}', space=vmem, size = 0x12000, scoped, tag = 'internal scratch']
  %s0 = inlined_call_operand.hbm [shape: f32[16,32], index: 0, kind: input, shape index: {}]
  %s1 = inlined_call_operand.vmem [shape: f32[1,32], index: 1, kind: input, shape index: {}]
  %s2 = inlined_call_operand.vmem [shape: f32[1,32], index: 2, kind: input, shape index: {}]
  %s3 = inlined_call_operand.hbm [shape: bf16[16,32], index: 3, kind: output, shape index: {}]
  %s4 = sld [smem:[#allocation0]]
  $region26: #{tpu_custom_call.1} parent=0
    _
  %s6 = ssub.s32 1, %s4
  %s7 = scalar_select 0, %s6, %s4
  $region1: #{tpu_custom_call.1} parent=0
    #allocation2 [shape = 'u8[8192]{0}', space=vmem, size = 0x2000, scoped, tag = 'input window, operand 0, single buffered']
    #allocation3 [shape = 's32[1]{0}', space=sflag, size = 0x4, scoped, tag = 'scoped memory for tpu_custom_call.1']
    #allocation4 [shape = 's32[1]{0}', space=sflag, size = 0x4, scoped, tag = 'scoped memory for tpu_custom_call.1']
    #allocation5 [shape = 'u8[4096]{0}', space=vmem, size = 0x1000, scoped, tag = 'output window, operand 0, single buffered']
    %8 = vsyncpa [#allocation3], 0
    %9 = vsyncpa [#allocation4], 0
    // Predicated region
    $region2: #{tpu_custom_call.1} parent=1 // pred_check
      _
    $region3: #{tpu_custom_call.1} parent=1 // pred_check_branch
      %11 = sbr.rel (0) target = $region5
    $region4: #{tpu_custom_call.1} parent=1 // pred_region
      %s13 = ssub.s32 256, 256
      %14 = vsyncadd [#allocation3], %s13
      %s15 = sshll.u32 [#allocation2], 4
      %s16 = int_to_ptr.vmem [resolvable:$true] %s15
      %21 = dma.hbm_to_vmem [thread:$0]  %s0, 256, %s16, [#allocation3], 128, 128, 8
    $region5: #{tpu_custom_call.1} parent=1 // pred_fallthru
      _
    // Predicated region
    $region6: #{tpu_custom_call.1} parent=1 // pred_check
      _
    $region7: #{tpu_custom_call.1} parent=1 // pred_check_branch
      %23 = sbr.rel (0) target = $region9
    $region8: #{tpu_custom_call.1} parent=1 // pred_region
      _
    $region9: #{tpu_custom_call.1} parent=1 // pred_fallthru
      _
    // Predicated region
    $region10: #{tpu_custom_call.1} parent=1 // pred_check
      _
    $region11: #{tpu_custom_call.1} parent=1 // pred_check_branch
      %25 = sbr.rel (0) target = $region13
    $region12: #{tpu_custom_call.1} parent=1 // pred_region
      _
    $region13: #{tpu_custom_call.1} parent=1 // pred_fallthru
      _
    // Predicated region
    $region14: #{tpu_custom_call.1} parent=1 // pred_check
      _
    $region15: #{tpu_custom_call.1} parent=1 // pred_check_branch
      %27 = sbr.rel (0) target = $region17
    $region16: #{tpu_custom_call.1} parent=1 // pred_region
      %28 = dma.done [#allocation3], 256
    $region17: #{tpu_custom_call.1} parent=1 // pred_fallthru
      _
    %v29 = vld [vmem:[#allocation2] sm:$0xff]
    %v30 = vld [vmem:[#allocation2 + $0x8] sm:$0xff]
    %vm31 = vcmask 261120
    %v32 = vsel %vm31, %v29, 0.0
    %33 = vadd.xlane.f32.xlu0 %v32
    %v34 = vpop.xlane.xlu0 %33
    %v35 = vsel %vm31, %v30, 0.0
    %36 = vadd.xlane.f32.xlu0 %v35
    %v37 = vpop.xlane.xlu0 %36
    %v38 = vrcp.pop 32.0
    %v39 = vmul.f32 %v34, %v38
    %v40 = vmul.f32 %v37, %v38
    %v41 = vsub.f32 %v29, %v39
    %v42 = vsub.f32 %v30, %v40
    %v43 = vmul.f32 %v41, %v41
    %v44 = vmul.f32 %v42, %v42
    %v45 = vsel %vm31, %v43, 0.0
    %46 = vadd.xlane.f32.xlu0 %v45
    %v47 = vpop.xlane.xlu0 %46
    %v48 = vsel %vm31, %v44, 0.0
    %49 = vadd.xlane.f32.xlu0 %v48
    %v50 = vpop.xlane.xlu0 %49
    %v51 = vmul.f32 %v47, %v38
    %v52 = vmul.f32 %v50, %v38
    %v53 = vadd.f32 %v51, 1e-12
    %v54 = vadd.f32 %v52, 1e-12
    %v55 = vrsqrt.pop %v53
    %v56 = vrsqrt.pop %v54
    %v57 = vmul.f32 %v41, %v55
    %v58 = vmul.f32 %v42, %v56
    %v59 = vld [vmem:[%s1] sm:$0x1]
    %v61 = vlaneseq
    %v62 = vshrl.u32 %v61, 7
    %v63 = vsub.s32 0, %v62
    %v64 = vrot.slane %v59, %v63
    %v66 = vmul.f32 %v57, %v64
    %v67 = vmul.f32 %v58, %v64
    %v68 = vld [vmem:[%s2] sm:$0x1]
    %v70 = vlaneseq
    %v71 = vshrl.u32 %v70, 7
    %v72 = vsub.s32 0, %v71
    %v73 = vrot.slane %v68, %v72
    %v75 = vadd.f32 %v66, %v73
    %v76 = vadd.f32 %v67, %v73
    %v77 = vpack.c.bf16 %v76, %v75
    %v79 = vunpack.c.l.b16 %v77
    %v80 = vunpack.c.h.b16 %v77
    %v81 = vpack.c.b16 %v79, %v79
    %v82 = vpack.c.b16 %v80, %v80
    %vm85 = vcmask 257024
    %86 = vst.msk [vmem:[#allocation5] sm:$0xf] %vm85, %v81
    %87 = vst.msk [vmem:[#allocation5 + $0x4] sm:$0xf] %vm85, %v82
    // Predicated region
    $region18: #{tpu_custom_call.1} parent=1 // pred_check
      _
    $region19: #{tpu_custom_call.1} parent=1 // pred_check_branch
      %89 = sbr.rel (0) target = $region21
    $region20: #{tpu_custom_call.1} parent=1 // pred_region
      %s91 = ssub.s32 128, 128
      %92 = vsyncadd [#allocation4], %s91
      %s93 = sshll.u32 [#allocation5], 4
      %s94 = int_to_ptr.vmem [resolvable:$true] %s93
      %99 = dma.vmem_to_hbm [thread:$0]  %s94, 128, %s3, [#allocation4], 64, 64, 4
    $region21: #{tpu_custom_call.1} parent=1 // pred_fallthru
      _
    // Predicated region
    $region22: #{tpu_custom_call.1} parent=1 // pred_check
      _
    $region23: #{tpu_custom_call.1} parent=1 // pred_check_branch
      %101 = sbr.rel (0) target = $region25
    $region24: #{tpu_custom_call.1} parent=1 // pred_region
      %102 = dma.done [#allocation4], 128
    $region25: #{tpu_custom_call.1} parent=1 // pred_fallthru
      _
    %103 = vsyncpa [#allocation3], 1
    %104 = vsyncpa [#allocation4], 1

</llo_original>
